<compile_context>
chip_gen: v7x
topology: tpu7x:2x2x1
jax: 0.10.0
libtpu: 0.0.40
codegen_flags: <defaults>
</compile_context>

<pallas_src>
import functools

import jax
import jax.numpy as jnp
from jax.experimental import pallas as pl
from jax.experimental.pallas import tpu as pltpu


def _xornet_kernel(x_ref, w1_ref, b1_ref, w2_ref, b2_ref, o_ref, *, bf16_act):
    # x_ref : [2, TB]   features on sublanes, batch on lanes
    # w1_ref: [H, 2]    PyTorch nn.Linear layout (out_features, in_features)
    # b1_ref: [H, 1]
    # w2_ref: [H, 1]    second-layer weight as a column (== w2.T)
    # b2_ref: [1]       scalar bias in SMEM
    # o_ref : [1, TB]   batch on lanes (lane-dense store)
    x0 = x_ref[0:1, :]                                   # [1, TB]
    x1 = x_ref[1:2, :]                                   # [1, TB]

    # Layer 1 (K=2): two VPU broadcast-FMAs. MXU would be <2% utilized here.
    h = w1_ref[:, 0:1] * x0 + w1_ref[:, 1:2] * x1 + b1_ref[...]     # [H, TB] f32

    # sigmoid(x) == 0.5*tanh(0.5*x) + 0.5: one EUP push per vreg instead of
    # exp + reciprocal. EUP (1 slot) is the binding slot for the [H, TB] tensor;
    # the mul/add go to the VPU (4 slots), which has slack.
    if bf16_act:
        # v6e/v7x only: bf16 packs [16,128] vregs -> ~2x EUP/VPU throughput.
        hb = h.astype(jnp.bfloat16)
        a = 0.5 * jnp.tanh(0.5 * hb) + 0.5                           # [H, TB] bf16
        prod = a * w2_ref[...].astype(jnp.bfloat16)                  # bf16 VPU mul
        y = jnp.sum(prod, axis=0, keepdims=True, dtype=jnp.float32)  # f32 accumulate
    else:
        a = 0.5 * jnp.tanh(0.5 * h) + 0.5                            # [H, TB] f32
        y = jnp.sum(a * w2_ref[...], axis=0, keepdims=True)          # [1, TB] (XLU)

    y = y + b2_ref[0]
    # Layer-2 sigmoid is only [1, TB]; its EUP traffic is negligible.
    o_ref[...] = jax.nn.sigmoid(y).astype(o_ref.dtype)


def _pick_batch_block(b: int, h: int, block_b: int) -> tuple[int, int, int]:
    """Returns (tb, n_blocks, b_out) — all Python ints derived from static shapes."""
    # Correctness fix: enforce block_b as a multiple of the 128-lane tile.
    block_b = max(128, ((int(block_b) + 127) // 128) * 128)

    # Cap the block so the [H, TB] f32 hidden temporaries plus the double-buffered
    # x/out tiles fit v5e's 16 MiB default scoped VMEM (leave headroom; v6e/v7x
    # default to 32 MiB scoped, so the same cap is safe everywhere).
    vmem_budget = 12 * 1024 * 1024
    bytes_per_lane = 4 * (2 * h + 8)      # ~2 [H,*] f32 temps + x/out double buffers
    vmem_cap = max(128, (vmem_budget // bytes_per_lane) // 128 * 128)

    b128 = ((b + 127) // 128) * 128       # batch rounded up to the lane tile
    tb = min(b128, block_b, vmem_cap)

    # v7x: keep >= 2 grid blocks when the batch is large enough so the "parallel"
    # axis shards across both TensorCores (a no-op cost on single-TC v5e/v6e).
    if tb >= b128 and b128 >= 256:
        tb = ((b128 // 2 + 127) // 128) * 128

    n_blocks = pl.cdiv(b128, tb)
    b_out = n_blocks * tb                 # padded output width (lane-dense stores)
    return tb, n_blocks, b_out


@functools.partial(jax.jit, static_argnames=("block_b", "bf16_act"))
def xornet_forward_t(x_t, w1, b1, w2, b2, *, block_b=32768, bf16_act=False):
    """Zero-copy path: x_t is feature-major [2, B]. Returns [1, B] float32."""
    _, B = x_t.shape
    H = w1.shape[0]

    tb, n_blocks, b_out = _pick_batch_block(B, H, block_b)

    x_k = x_t.astype(jnp.float32)
    if B != b_out:
        # Pad only when the grid's padded width differs from B; for large batches that
        # are block-aligned this is a no-op, and otherwise it fuses into this jit
        # (no standalone extra HBM pass like the old always-pad wrapper).
        x_k = jnp.pad(x_k, ((0, 0), (0, b_out - B)))

    w1_k = w1.astype(jnp.float32)                    # [H, 2]
    b1_k = b1.astype(jnp.float32).reshape(H, 1)      # [H, 1]
    w2_k = w2.astype(jnp.float32).reshape(H, 1)      # [H, 1]  (== w2.T, free reshape)
    b2_k = b2.astype(jnp.float32).reshape(1)         # [1]  -> SMEM scalar

    kernel = functools.partial(_xornet_kernel, bf16_act=bf16_act)

    y = pl.pallas_call(
        kernel,
        out_shape=jax.ShapeDtypeStruct((1, b_out), jnp.float32),
        grid_spec=pltpu.PrefetchScalarGridSpec(
            num_scalar_prefetch=0,
            grid=(n_blocks,),
            in_specs=[
                pl.BlockSpec((2, tb), lambda i: (0, i)),   # x (batch-blocked)
                pl.BlockSpec((H, 2), lambda i: (0, 0)),    # w1   (resident)
                pl.BlockSpec((H, 1), lambda i: (0, 0)),    # b1   (resident)
                pl.BlockSpec((H, 1), lambda i: (0, 0)),    # w2^T (resident)
                pl.BlockSpec(memory_space=pltpu.SMEM),     # b2 scalar in SMEM
            ],
            out_specs=pl.BlockSpec((1, tb), lambda i: (0, i)),
        ),
        compiler_params=pltpu.CompilerParams(
            dimension_semantics=("parallel",)),
    )(x_k, w1_k, b1_k, w2_k, b2_k)

    return y[:, :B]


@functools.partial(jax.jit, static_argnames=("block_b", "bf16_act"))
def xornet_forward(x, w1, b1, w2, b2, *, block_b=32768, bf16_act=False):
    """PyTorch-facing layout: x [B, 2] -> [B, 1].

    Matches `sigmoid(sigmoid(x @ w1.T + b1) @ w2.T + b2)` with nn.Linear-native
    parameter layouts (w1 [H,2], b1 [H], w2 [1,H], b2 [1]). The cast/transpose
    fuses into this jit, so the wrapper adds no standalone HBM passes.
    """
    B = x.shape[0]
    y_t = xornet_forward_t(x.astype(jnp.float32).T, w1, b1, w2, b2,
                           block_b=block_b, bf16_act=bf16_act)
    return y_t.reshape(1, B).T.reshape(B, 1)


def init_params(key, hidden_size):
    """PyTorch nn.Linear default init (U(-1/sqrt(fan_in), +)), native layouts."""
    k1, k2, k3, k4 = jax.random.split(key, 4)
    bound1 = 1.0 / jnp.sqrt(2.0)                    # fan_in = 2
    bound2 = 1.0 / jnp.sqrt(float(hidden_size))     # fan_in = hidden_size
    w1 = jax.random.uniform(k1, (hidden_size, 2), jnp.float32, -bound1, bound1)
    b1 = jax.random.uniform(k2, (hidden_size,), jnp.float32, -bound1, bound1)
    w2 = jax.random.uniform(k3, (1, hidden_size), jnp.float32, -bound2, bound2)
    b2 = jax.random.uniform(k4, (1,), jnp.float32, -bound2, bound2)
    return w1, b1, w2, b2


if __name__ == "__main__":
    hidden_size = 32
    batch = 8

    key = jax.random.PRNGKey(0)
    k_params, k_x = jax.random.split(key)
    w1, b1, w2, b2 = init_params(k_params, hidden_size)

    # XOR-style binary inputs, shape [batch, 2] (same as the PyTorch model_input).
    x = jax.random.bernoulli(k_x, 0.5, (batch, 2)).astype(jnp.float32)

    out = jax.block_until_ready(xornet_forward(x, w1, b1, w2, b2))

    # Pure-JAX reference of the same PyTorch math.
    ref = jax.nn.sigmoid(jax.nn.sigmoid(x @ w1.T + b1) @ w2.T + b2)
    assert out.shape == (batch, 1)
    # 5e-5: tanh-form sigmoid differs from exp-form only at transcendental-approx level.
    assert jnp.allclose(out, ref, atol=5e-5), "mismatch vs reference"

    # Also exercise the multi-block path (2 grid blocks, non-128-multiple batch).
    x_big = jax.random.bernoulli(jax.random.PRNGKey(1), 0.5, (300, 2)).astype(jnp.float32)
    out_big = jax.block_until_ready(xornet_forward(x_big, w1, b1, w2, b2))
    ref_big = jax.nn.sigmoid(jax.nn.sigmoid(x_big @ w1.T + b1) @ w2.T + b2)
    assert out_big.shape == (300, 1)
    assert jnp.allclose(out_big, ref_big, atol=5e-5), "mismatch vs reference (multi-block)"

    print("KERNEL_OK")
</pallas_src>

<mosaic_0001>
module attributes {stable_mosaic.version = 11 : i64} {
  func.func @_xornet_kernel(%arg0: i32, %arg1: memref<2x128xf32, #tpu.memory_space<vmem>>, %arg2: memref<32x2xf32, #tpu.memory_space<vmem>>, %arg3: memref<32x1xf32, #tpu.memory_space<vmem>>, %arg4: memref<32x1xf32, #tpu.memory_space<vmem>>, %arg5: memref<1xf32, #tpu.memory_space<smem>>, %arg6: memref<1x128xf32, #tpu.memory_space<vmem>>) attributes {dimension_semantics = [#tpu.dimension_semantics<parallel>], iteration_bounds = array<i64: 1>, scalar_prefetch = 0 : i64, scratch_operands = 0 : i64, tpu.core_type = #tpu.core_type<tc>, window_params = [{transform_indices = @transform_0, window_bounds = array<i64: 2, 128>}, {pipeline_mode = #tpu.pipeline_mode<synchronous>, transform_indices = @transform_1, window_bounds = array<i64: 32, 2>}, {pipeline_mode = #tpu.pipeline_mode<synchronous>, transform_indices = @transform_2, window_bounds = array<i64: 32, 1>}, {pipeline_mode = #tpu.pipeline_mode<synchronous>, transform_indices = @transform_3, window_bounds = array<i64: 32, 1>}, {transform_indices = @transform_4, window_bounds = array<i64: 1>}, {transform_indices = @transform_5, window_bounds = array<i64: 1, 128>}]} {
    %c0 = arith.constant 0 : index
    %c0_0 = arith.constant 0 : index
    %0 = vector.load %arg1[%c0, %c0_0] : memref<2x128xf32, #tpu.memory_space<vmem>>, vector<1x128xf32>
    %c1 = arith.constant 1 : index
    %c0_1 = arith.constant 0 : index
    %1 = vector.load %arg1[%c1, %c0_1] : memref<2x128xf32, #tpu.memory_space<vmem>>, vector<1x128xf32>
    %c0_2 = arith.constant 0 : index
    %c0_3 = arith.constant 0 : index
    %2 = vector.load %arg2[%c0_2, %c0_3] : memref<32x2xf32, #tpu.memory_space<vmem>>, vector<32x1xf32>
    %3 = vector.broadcast %2 : vector<32x1xf32> to vector<32x128xf32>
    %4 = vector.broadcast %0 : vector<1x128xf32> to vector<32x128xf32>
    %5 = arith.mulf %3, %4 : vector<32x128xf32>
    %c0_4 = arith.constant 0 : index
    %c1_5 = arith.constant 1 : index
    %6 = vector.load %arg2[%c0_4, %c1_5] : memref<32x2xf32, #tpu.memory_space<vmem>>, vector<32x1xf32>
    %7 = vector.broadcast %6 : vector<32x1xf32> to vector<32x128xf32>
    %8 = vector.broadcast %1 : vector<1x128xf32> to vector<32x128xf32>
    %9 = arith.mulf %7, %8 : vector<32x128xf32>
    %10 = arith.addf %5, %9 : vector<32x128xf32>
    %c0_6 = arith.constant 0 : index
    %c0_7 = arith.constant 0 : index
    %11 = vector.load %arg3[%c0_6, %c0_7] : memref<32x1xf32, #tpu.memory_space<vmem>>, vector<32x1xf32>
    %12 = vector.broadcast %11 : vector<32x1xf32> to vector<32x128xf32>
    %13 = arith.addf %10, %12 : vector<32x128xf32>
    %cst = arith.constant 5.000000e-01 : f32
    %14 = vector.broadcast %cst : f32 to vector<32x128xf32>
    %15 = arith.mulf %14, %13 : vector<32x128xf32>
    %16 = math.tanh %15 : vector<32x128xf32>
    %cst_8 = arith.constant 5.000000e-01 : f32
    %17 = vector.broadcast %cst_8 : f32 to vector<32x128xf32>
    %18 = arith.mulf %17, %16 : vector<32x128xf32>
    %cst_9 = arith.constant 5.000000e-01 : f32
    %19 = vector.broadcast %cst_9 : f32 to vector<32x128xf32>
    %20 = arith.addf %18, %19 : vector<32x128xf32>
    %c0_10 = arith.constant 0 : index
    %c0_11 = arith.constant 0 : index
    %21 = vector.load %arg4[%c0_10, %c0_11] : memref<32x1xf32, #tpu.memory_space<vmem>>, vector<32x1xf32>
    %22 = vector.broadcast %21 : vector<32x1xf32> to vector<32x128xf32>
    %23 = arith.mulf %20, %22 : vector<32x128xf32>
    %cst_12 = arith.constant dense<0.000000e+00> : vector<128xf32>
    %24 = vector.multi_reduction <add>, %23, %cst_12 [0] : vector<32x128xf32> to vector<128xf32>
    %25 = vector.shape_cast %24 : vector<128xf32> to vector<1x128xf32>
    %c0_13 = arith.constant 0 : index
    %26 = memref.load %arg5[%c0_13] : memref<1xf32, #tpu.memory_space<smem>>
    %27 = vector.broadcast %26 : f32 to vector<1x128xf32>
    %28 = arith.addf %25, %27 : vector<1x128xf32>
    %29 = arith.negf %28 : vector<1x128xf32>
    %30 = math.exp %29 : vector<1x128xf32>
    %cst_14 = arith.constant 1.000000e+00 : f32
    %31 = vector.broadcast %cst_14 : f32 to vector<1x128xf32>
    %32 = arith.addf %31, %30 : vector<1x128xf32>
    %33 = arith.divf %31, %32 : vector<1x128xf32>
    %c0_15 = arith.constant 0 : index
    %c0_16 = arith.constant 0 : index
    %34 = vector.load %arg6[%c0_15, %c0_16] : memref<1x128xf32, #tpu.memory_space<vmem>>, vector<1x128xf32>
    tpu.vector_store %arg6[%c0_15, %c0_16], %33 {strides = array<i32>} : memref<1x128xf32, #tpu.memory_space<vmem>>, vector<1x128xf32>,
    return
  }
  func.func @transform_0(%arg0: i32) -> (i32, i32) {
    %c0_i32 = arith.constant 0 : i32
    %c0_i32_0 = arith.constant 0 : i32
    return %c0_i32, %arg0 : i32, i32
  }
  func.func @transform_1(%arg0: i32) -> (i32, i32) {
    %c0_i32 = arith.constant 0 : i32
    %c0_i32_0 = arith.constant 0 : i32
    %c0_i32_1 = arith.constant 0 : i32
    return %c0_i32, %c0_i32_0 : i32, i32
  }
  func.func @transform_2(%arg0: i32) -> (i32, i32) {
    %c0_i32 = arith.constant 0 : i32
    %c0_i32_0 = arith.constant 0 : i32
    %c0_i32_1 = arith.constant 0 : i32
    return %c0_i32, %c0_i32_0 : i32, i32
  }
  func.func @transform_3(%arg0: i32) -> (i32, i32) {
    %c0_i32 = arith.constant 0 : i32
    %c0_i32_0 = arith.constant 0 : i32
    %c0_i32_1 = arith.constant 0 : i32
    return %c0_i32, %c0_i32_0 : i32, i32
  }
  func.func @transform_4(%arg0: i32) -> i32 {
    %c0_i32 = arith.constant 0 : i32
    %c0_i32_0 = arith.constant 0 : i32
    return %c0_i32 : i32
  }
  func.func @transform_5(%arg0: i32) -> (i32, i32) {
    %c0_i32 = arith.constant 0 : i32
    %c0_i32_0 = arith.constant 0 : i32
    return %c0_i32, %arg0 : i32, i32
  }
}

</mosaic_0001>

<llo_original>
// kernel: xornet_forward_t.1
$region0: #{xornet_forward_t.1}
  #allocation0 [shape = 'u32[]', space=smem, size = 0x4, offset = 0x4, fixed_abs, tag = 'smem constant byte address 0x4 - core index']
  #allocation1 [shape = 'u32[144,128]{1,0:T(1,128)}', space=vmem, size = 0x12000, scoped, tag = 'internal scratch']
  #allocation2 [shape = 'f32[1]{0:T(128)S(6)}', space=smem, size = 0x200, scoped, tag = 'scoped memory for xornet_forward_t.1']
  %s0 = inlined_call_operand.vmem [shape: f32[2,128], index: 0, kind: input, shape index: {}]
  %s1 = inlined_call_operand.vmem [shape: f32[32,2], index: 1, kind: input, shape index: {}]
  %s2 = inlined_call_operand.vmem [shape: f32[32,1], index: 2, kind: input, shape index: {}]
  %s3 = inlined_call_operand.vmem [shape: f32[32,1], index: 3, kind: input, shape index: {}]
  %s4 = inlined_call_operand.<no memory space> [shape: f32[1], index: 4, kind: input, shape index: {}]
  %s5 = inlined_call_operand.hbm [shape: f32[1,128], index: 5, kind: output, shape index: {}]
  %s6 = sld [smem:[#allocation0]]
  $region30: #{xornet_forward_t.1} parent=0
    _
  %s8 = ssub.s32 1, %s6
  %s9 = scalar_select 0, %s8, %s6
  %10 = sst [smem:[#allocation2]] %s4
  $region1: #{xornet_forward_t.1} parent=0
    #allocation3 [shape = 'u8[512]{0}', space=vmem, size = 0x400, scoped, tag = 'output window, operand 0, single buffered']
    #allocation4 [shape = 's32[1]{0}', space=sflag, size = 0x4, scoped, tag = 'scoped memory for xornet_forward_t.1']
    %11 = vsyncpa [#allocation4], 0
    // Predicated region
    $region2: #{xornet_forward_t.1} parent=1 // pred_check
      _
    $region3: #{xornet_forward_t.1} parent=1 // pred_check_branch
      %13 = sbr.rel (0) target = $region5
    $region4: #{xornet_forward_t.1} parent=1 // pred_region
      _
    $region5: #{xornet_forward_t.1} parent=1 // pred_fallthru
      _
    // Predicated region
    $region6: #{xornet_forward_t.1} parent=1 // pred_check
      _
    $region7: #{xornet_forward_t.1} parent=1 // pred_check_branch
      %15 = sbr.rel (0) target = $region9
    $region8: #{xornet_forward_t.1} parent=1 // pred_region
      _
    $region9: #{xornet_forward_t.1} parent=1 // pred_fallthru
      _
    // Predicated region
    $region10: #{xornet_forward_t.1} parent=1 // pred_check
      _
    $region11: #{xornet_forward_t.1} parent=1 // pred_check_branch
      %17 = sbr.rel (0) target = $region13
    $region12: #{xornet_forward_t.1} parent=1 // pred_region
      _
    $region13: #{xornet_forward_t.1} parent=1 // pred_fallthru
      _
    // Predicated region
    $region14: #{xornet_forward_t.1} parent=1 // pred_check
      _
    $region15: #{xornet_forward_t.1} parent=1 // pred_check_branch
      %19 = sbr.rel (0) target = $region17
    $region16: #{xornet_forward_t.1} parent=1 // pred_region
      _
    $region17: #{xornet_forward_t.1} parent=1 // pred_fallthru
      _
    // Predicated region
    $region18: #{xornet_forward_t.1} parent=1 // pred_check
      _
    $region19: #{xornet_forward_t.1} parent=1 // pred_check_branch
      %21 = sbr.rel (0) target = $region21
    $region20: #{xornet_forward_t.1} parent=1 // pred_region
      _
    $region21: #{xornet_forward_t.1} parent=1 // pred_fallthru
      _
    %v22 = vld [vmem:[%s0] sm:$0x1]
    %v23 = vld [vmem:[%s0 + $0x1] sm:$0x1]
    %v24 = vld [vmem:[%s1] sm:$0xff]
    %v25 = vld [vmem:[%s1 + $0x8] sm:$0xff]
    %v26 = vld [vmem:[%s1 + $0x10] sm:$0xff]
    %v27 = vld [vmem:[%s1 + $0x18] sm:$0xff]
    %29 = vset.pattern.permute.xlu0 0
    %30 = vperm.xlu0 %29, %v24
    %v31 = vpop.permute.xlu0 %30
    %34 = vset.pattern.permute.xlu0 0
    %35 = vperm.xlu0 %34, %v25
    %v36 = vpop.permute.xlu0 %35
    %39 = vset.pattern.permute.xlu0 0
    %40 = vperm.xlu0 %39, %v26
    %v41 = vpop.permute.xlu0 %40
    %44 = vset.pattern.permute.xlu0 0
    %45 = vperm.xlu0 %44, %v27
    %v46 = vpop.permute.xlu0 %45
    %v48 = vlaneseq
    %v49 = vshrl.u32 %v48, 7
    %v50 = vsub.s32 0, %v49
    %v51 = vrot.slane %v22, %v50
    %v52 = vmul.f32 %v31, %v51
    %v53 = vmul.f32 %v36, %v51
    %v54 = vmul.f32 %v41, %v51
    %v55 = vmul.f32 %v46, %v51
    %56 = vset.pattern.permute.xlu0 1
    %57 = vperm.xlu0 %56, %v24
    %v58 = vpop.permute.xlu0 %57
    %60 = vset.pattern.permute.xlu0 1
    %61 = vperm.xlu0 %60, %v25
    %v62 = vpop.permute.xlu0 %61
    %64 = vset.pattern.permute.xlu0 1
    %65 = vperm.xlu0 %64, %v26
    %v66 = vpop.permute.xlu0 %65
    %68 = vset.pattern.permute.xlu0 1
    %69 = vperm.xlu0 %68, %v27
    %v70 = vpop.permute.xlu0 %69
    %v72 = vlaneseq
    %v73 = vshrl.u32 %v72, 7
    %v74 = vsub.s32 0, %v73
    %v75 = vrot.slane %v23, %v74
    %v76 = vmul.f32 %v58, %v75
    %v77 = vmul.f32 %v62, %v75
    %v78 = vmul.f32 %v66, %v75
    %v79 = vmul.f32 %v70, %v75
    %v80 = vadd.f32 %v52, %v76
    %v81 = vadd.f32 %v53, %v77
    %v82 = vadd.f32 %v54, %v78
    %v83 = vadd.f32 %v55, %v79
    %v84 = vld [vmem:[%s2] sm:$0xff]
    %v85 = vld [vmem:[%s2 + $0x8] sm:$0xff]
    %v86 = vld [vmem:[%s2 + $0x10] sm:$0xff]
    %v87 = vld [vmem:[%s2 + $0x18] sm:$0xff]
    %89 = vset.pattern.permute.xlu0 0
    %90 = vperm.xlu0 %89, %v84
    %v91 = vpop.permute.xlu0 %90
    %94 = vset.pattern.permute.xlu0 0
    %95 = vperm.xlu0 %94, %v85
    %v96 = vpop.permute.xlu0 %95
    %99 = vset.pattern.permute.xlu0 0
    %100 = vperm.xlu0 %99, %v86
    %v101 = vpop.permute.xlu0 %100
    %104 = vset.pattern.permute.xlu0 0
    %105 = vperm.xlu0 %104, %v87
    %v106 = vpop.permute.xlu0 %105
    %v108 = vadd.f32 %v80, %v91
    %v109 = vadd.f32 %v81, %v96
    %v110 = vadd.f32 %v82, %v101
    %v111 = vadd.f32 %v83, %v106
    %v112 = vmul.f32 %v108, 0.5
    %v113 = vmul.f32 %v109, 0.5
    %v114 = vmul.f32 %v110, 0.5
    %v115 = vmul.f32 %v111, 0.5
    %v116 = vtanh.pop %v112
    %v117 = vtanh.pop %v113
    %v118 = vtanh.pop %v114
    %v119 = vtanh.pop %v115
    %v120 = vmul.f32 %v116, 0.5
    %v121 = vmul.f32 %v117, 0.5
    %v122 = vmul.f32 %v118, 0.5
    %v123 = vmul.f32 %v119, 0.5
    %v124 = vadd.f32 %v120, 0.5
    %v125 = vadd.f32 %v121, 0.5
    %v126 = vadd.f32 %v122, 0.5
    %v127 = vadd.f32 %v123, 0.5
    %v128 = vld [vmem:[%s3] sm:$0xff]
    %v129 = vld [vmem:[%s3 + $0x8] sm:$0xff]
    %v130 = vld [vmem:[%s3 + $0x10] sm:$0xff]
    %v131 = vld [vmem:[%s3 + $0x18] sm:$0xff]
    %133 = vset.pattern.permute.xlu0 0
    %134 = vperm.xlu0 %133, %v128
    %v135 = vpop.permute.xlu0 %134
    %138 = vset.pattern.permute.xlu0 0
    %139 = vperm.xlu0 %138, %v129
    %v140 = vpop.permute.xlu0 %139
    %143 = vset.pattern.permute.xlu0 0
    %144 = vperm.xlu0 %143, %v130
    %v145 = vpop.permute.xlu0 %144
    %148 = vset.pattern.permute.xlu0 0
    %149 = vperm.xlu0 %148, %v131
    %v150 = vpop.permute.xlu0 %149
    %v152 = vmul.f32 %v124, %v135
    %v153 = vmul.f32 %v125, %v140
    %v154 = vmul.f32 %v126, %v145
    %v155 = vmul.f32 %v127, %v150
    %v156 = vadd.f32 %v152, %v153
    %v157 = vadd.f32 %v156, %v154
    %v158 = vadd.f32 %v157, %v155
    %v159 = vrot.slane %v158, 4
    %v160 = vadd.f32 %v158, %v159
    %v161 = vrot.slane %v160, 2
    %v162 = vadd.f32 %v160, %v161
    %v163 = vrot.slane %v162, 1
    %v164 = vadd.f32 %v162, %v163
    %s165 = sld [smem:[#allocation2]]
    %v166 = vstv %s165
    %v167 = vadd.f32 %v164, %v166
    %v168 = vxor.u32 %v167, 2147483648
    %v169 = vmul.f32 %v168, 1.442695
    %v170 = vpow.pop %v169
    %v171 = vadd.f32 %v170, 1.0
    %v172 = vrcp.pop %v171
    %v173 = vmul.f32 1.0, %v172
    %174 = vst [vmem:[#allocation3] sm:$0x1] %v173
    // Predicated region
    $region22: #{xornet_forward_t.1} parent=1 // pred_check
      _
    $region23: #{xornet_forward_t.1} parent=1 // pred_check_branch
      %176 = sbr.rel (0) target = $region25
    $region24: #{xornet_forward_t.1} parent=1 // pred_region
      %s178 = ssub.s32 16, 16
      %179 = vsyncadd [#allocation4], %s178
      %s181 = sshll.u32 [#allocation3], 4
      %s182 = int_to_ptr.vmem [resolvable:$true] %s181
      %184 = dma.vmem_to_hbm [thread:$0]  %s182, 16, %s5, [#allocation4]
    $region25: #{xornet_forward_t.1} parent=1 // pred_fallthru
      _
    // Predicated region
    $region26: #{xornet_forward_t.1} parent=1 // pred_check
      _
    $region27: #{xornet_forward_t.1} parent=1 // pred_check_branch
      %186 = sbr.rel (0) target = $region29
    $region28: #{xornet_forward_t.1} parent=1 // pred_region
      %187 = dma.done [#allocation4], 16
    $region29: #{xornet_forward_t.1} parent=1 // pred_fallthru
      _
    %188 = vsyncpa [#allocation4], 1

</llo_original>
